<compile_context>
chip_gen: v7x
topology: tpu7x:2x2x1
jax: 0.10.0
libtpu: 0.0.40
codegen_flags: <defaults>
</compile_context>

<pallas_src>
import functools

import jax
import jax.numpy as jnp
from jax.experimental import pallas as pl
from jax.experimental.pallas import tpu as pltpu


def _round_up(n, m):
    return (n + m - 1) // m * m


# ---------------------------------------------------------------------------
# Pallas kernel: acc += x_tile @ Wt_tile ; on last reduction step add bias.
# ---------------------------------------------------------------------------
def _spmv_bias_kernel(x_ref, wt_ref, b_ref, o_ref, acc_ref):
    # x_ref: (1, tc) bf16, wt_ref: (tc, tr) bf16, b_ref: (1, tr) f32,
    # o_ref: (1, tr) f32, acc_ref: (1, tr) f32 scratch (lives across k).
    k = pl.program_id(1)

    @pl.when(k == 0)
    def _():
        acc_ref[...] = jnp.zeros_like(acc_ref)

    acc_ref[...] += jnp.dot(
        x_ref[...], wt_ref[...], preferred_element_type=jnp.float32
    )

    @pl.when(k == pl.num_programs(1) - 1)
    def _():
        o_ref[...] = (acc_ref[...] + b_ref[...]).astype(o_ref.dtype)


# ---------------------------------------------------------------------------
# Wrapper: pad / transpose to a lane-dense formulation and launch the kernel.
# ---------------------------------------------------------------------------
@functools.partial(jax.jit, static_argnames=("tile_r", "tile_c", "weight_dtype"))
def sparse_prepruned_forward(w_dense, layer_input, bias, *,
                             tile_r=256, tile_c=512,
                             weight_dtype=jnp.bfloat16):
    """y = (W @ x).squeeze(1) + bias.  W: (R, C), x: (C, 1), bias: (R,) -> (R,)."""
    R, C = w_dense.shape

    # 128-aligned tiles, clamped to the (padded) problem size.
    tr = min(tile_r, _round_up(R, 128))
    tc = min(tile_c, _round_up(C, 128))
    r_pad = _round_up(R, tr)
    c_pad = _round_up(C, tc)

    # Lane-dense reorientation + zero padding (zeros do not change the result).
    wt = jnp.zeros((c_pad, r_pad), dtype=weight_dtype)
    wt = wt.at[:C, :R].set(w_dense.T.astype(weight_dtype))
    x = jnp.zeros((1, c_pad), dtype=weight_dtype)
    x = x.at[0, :C].set(layer_input[:, 0].astype(weight_dtype))
    b = jnp.zeros((1, r_pad), dtype=jnp.float32)
    b = b.at[0, :R].set(bias.astype(jnp.float32))

    grid = (r_pad // tr, c_pad // tc)

    out = pl.pallas_call(
        _spmv_bias_kernel,
        out_shape=jax.ShapeDtypeStruct((1, r_pad), jnp.float32),
        grid_spec=pltpu.PrefetchScalarGridSpec(
            num_scalar_prefetch=0,
            grid=grid,
            in_specs=[
                pl.BlockSpec((1, tc), lambda i, k: (0, k)),    # x row-vector tile
                pl.BlockSpec((tc, tr), lambda i, k: (k, i)),   # streamed W^T tile
                pl.BlockSpec((1, tr), lambda i, k: (0, i)),    # bias tile
            ],
            out_specs=pl.BlockSpec((1, tr), lambda i, k: (0, i)),
            scratch_shapes=[pltpu.VMEM((1, tr), jnp.float32)],
        ),
        compiler_params=pltpu.CompilerParams(
            dimension_semantics=("parallel", "arbitrary"),
            vmem_limit_bytes=32 * 1024 * 1024,
        ),
    )(x, wt, b)

    return out[0, :R]  # undo padding; equivalent of .squeeze(1)


# ---------------------------------------------------------------------------
# Parameter construction (mirrors SparsePrePrunedLayer.__init__)
# ---------------------------------------------------------------------------
def build_params(distances, key):
    """Densified sparse weight matrix and bias, built deterministically."""
    rows, cols = [], []
    for r, nbrs in distances.items():
        for c in nbrs.keys():
            rows.append(r)
            cols.append(c)
    total_values = len(rows)
    R = max(distances.keys()) + 1        # sparse_coo_tensor infers size from max index
    C = max(cols) + 1

    k_vals, k_bias = jax.random.split(key)
    values = jax.random.normal(k_vals, (total_values,), dtype=jnp.float32)
    bias = jax.random.normal(k_bias, (len(distances),), dtype=jnp.float32)

    # torch COO coalescing SUMS duplicate (row, col) entries -> use .add.
    w_dense = jnp.zeros((R, C), dtype=jnp.float32)
    w_dense = w_dense.at[jnp.array(rows), jnp.array(cols)].add(values)
    return w_dense, bias


# ---------------------------------------------------------------------------
if __name__ == "__main__":
    # Synthetic "distances" dict: 8 output nodes, each connected to a few of
    # 16 input nodes (value = distance; only the keys/structure matter).
    R, C = 8, 16
    distances = {
        r: {(r * 3 + j) % C: float(j + 1) for j in range(3 + (r % 2))}
        for r in range(R)
    }

    key = jax.random.PRNGKey(0)
    k_params, k_input = jax.random.split(key)

    w_dense, bias = build_params(distances, k_params)
    C_in = w_dense.shape[1]
    layer_input = jax.random.normal(k_input, (C_in, 1), dtype=jnp.float32)

    y = sparse_prepruned_forward(w_dense, layer_input, bias)
    y = jax.block_until_ready(y)

    # Reference with the same bf16 streaming precision (f32 accumulation).
    w_ref = w_dense.astype(jnp.bfloat16).astype(jnp.float32)
    x_ref = layer_input.astype(jnp.bfloat16).astype(jnp.float32)
    y_ref = (w_ref @ x_ref)[:, 0] + bias

    assert y.shape == (w_dense.shape[0],)
    assert jnp.allclose(y, y_ref, atol=1e-4, rtol=1e-4)

    print("KERNEL_OK")
</pallas_src>

<mosaic_0001>
module attributes {stable_mosaic.version = 11 : i64} {
  func.func @_spmv_bias_kernel(%arg0: i32, %arg1: i32, %arg2: memref<1x128xbf16, #tpu.memory_space<vmem>>, %arg3: memref<128x128xbf16, #tpu.memory_space<vmem>>, %arg4: memref<1x128xf32, #tpu.memory_space<vmem>>, %arg5: memref<1x128xf32, #tpu.memory_space<vmem>>, %arg6: memref<1x128xf32, #tpu.memory_space<vmem>>) attributes {dimension_semantics = [#tpu.dimension_semantics<parallel>, #tpu.dimension_semantics<arbitrary>], iteration_bounds = array<i64: 1, 1>, scalar_prefetch = 0 : i64, scratch_operands = 1 : i64, tpu.core_type = #tpu.core_type<tc>, window_params = [{transform_indices = @transform_0, window_bounds = array<i64: 1, 128>}, {transform_indices = @transform_1, window_bounds = array<i64: 128, 128>}, {transform_indices = @transform_2, window_bounds = array<i64: 1, 128>}, {transform_indices = @transform_3, window_bounds = array<i64: 1, 128>}]} {
    %c0_i32 = arith.constant 0 : i32
    %0 = arith.cmpi eq, %arg1, %c0_i32 : i32
    %1 = arith.extui %0 : i1 to i32
    %c0_i32_0 = arith.constant 0 : i32
    %2 = arith.cmpi ne, %1, %c0_i32_0 : i32
    scf.if %2 {
      %cst_10 = arith.constant 0.000000e+00 : f32
      %12 = vector.broadcast %cst_10 : f32 to vector<1x128xf32>
      %c0_11 = arith.constant 0 : index
      %c0_12 = arith.constant 0 : index
      %13 = vector.load %arg6[%c0_11, %c0_12] : memref<1x128xf32, #tpu.memory_space<vmem>>, vector<1x128xf32>
      tpu.vector_store %arg6[%c0_11, %c0_12], %12 {strides = array<i32>} : memref<1x128xf32, #tpu.memory_space<vmem>>, vector<1x128xf32>,
    } else {
    }
    %c0 = arith.constant 0 : index
    %c0_1 = arith.constant 0 : index
    %3 = vector.load %arg6[%c0, %c0_1] : memref<1x128xf32, #tpu.memory_space<vmem>>, vector<1x128xf32>
    %c0_2 = arith.constant 0 : index
    %c0_3 = arith.constant 0 : index
    %4 = vector.load %arg2[%c0_2, %c0_3] : memref<1x128xbf16, #tpu.memory_space<vmem>>, vector<1x128xbf16>
    %c0_4 = arith.constant 0 : index
    %c0_5 = arith.constant 0 : index
    %5 = vector.load %arg3[%c0_4, %c0_5] : memref<128x128xbf16, #tpu.memory_space<vmem>>, vector<128x128xbf16>
    %cst = arith.constant dense<0.000000e+00> : vector<1x128xf32>
    %6 = tpu.matmul %4, %5, %cst {dimension_numbers = #tpu.dot_dimension_numbers<[1], [0], [0], [1], [0, 0, 1, 1], [], []>} : vector<1x128xbf16>, vector<128x128xbf16>, vector<1x128xf32> -> vector<1x128xf32>
    %7 = arith.addf %3, %6 : vector<1x128xf32>
    %c0_6 = arith.constant 0 : index
    %c0_7 = arith.constant 0 : index
    %8 = vector.load %arg6[%c0_6, %c0_7] : memref<1x128xf32, #tpu.memory_space<vmem>>, vector<1x128xf32>
    tpu.vector_store %arg6[%c0_6, %c0_7], %7 {strides = array<i32>} : memref<1x128xf32, #tpu.memory_space<vmem>>, vector<1x128xf32>,
    %c0_i32_8 = arith.constant 0 : i32
    %9 = arith.cmpi eq, %arg1, %c0_i32_8 : i32
    %10 = arith.extui %9 : i1 to i32
    %c0_i32_9 = arith.constant 0 : i32
    %11 = arith.cmpi ne, %10, %c0_i32_9 : i32
    scf.if %11 {
      %c0_10 = arith.constant 0 : index
      %c0_11 = arith.constant 0 : index
      %12 = vector.load %arg6[%c0_10, %c0_11] : memref<1x128xf32, #tpu.memory_space<vmem>>, vector<1x128xf32>
      %c0_12 = arith.constant 0 : index
      %c0_13 = arith.constant 0 : index
      %13 = vector.load %arg4[%c0_12, %c0_13] : memref<1x128xf32, #tpu.memory_space<vmem>>, vector<1x128xf32>
      %14 = arith.addf %12, %13 : vector<1x128xf32>
      %c0_14 = arith.constant 0 : index
      %c0_15 = arith.constant 0 : index
      %15 = vector.load %arg5[%c0_14, %c0_15] : memref<1x128xf32, #tpu.memory_space<vmem>>, vector<1x128xf32>
      tpu.vector_store %arg5[%c0_14, %c0_15], %14 {strides = array<i32>} : memref<1x128xf32, #tpu.memory_space<vmem>>, vector<1x128xf32>,
    } else {
    }
    return
  }
  func.func @transform_0(%arg0: i32, %arg1: i32) -> (i32, i32) {
    %c0_i32 = arith.constant 0 : i32
    %c0_i32_0 = arith.constant 0 : i32
    return %c0_i32, %arg1 : i32, i32
  }
  func.func @transform_1(%arg0: i32, %arg1: i32) -> (i32, i32) {
    %c0_i32 = arith.constant 0 : i32
    return %arg1, %arg0 : i32, i32
  }
  func.func @transform_2(%arg0: i32, %arg1: i32) -> (i32, i32) {
    %c0_i32 = arith.constant 0 : i32
    %c0_i32_0 = arith.constant 0 : i32
    return %c0_i32, %arg0 : i32, i32
  }
  func.func @transform_3(%arg0: i32, %arg1: i32) -> (i32, i32) {
    %c0_i32 = arith.constant 0 : i32
    %c0_i32_0 = arith.constant 0 : i32
    return %c0_i32, %arg0 : i32, i32
  }
}

</mosaic_0001>

<llo_original>
// kernel: sparse_prepruned_forward.1
$region0: #{sparse_prepruned_forward.1}
  #allocation0 [shape = 'u32[]', space=smem, size = 0x4, offset = 0x4, fixed_abs, tag = 'smem constant byte address 0x4 - core index']
  #allocation1 [shape = 'u32[144,128]{1,0:T(1,128)}', space=vmem, size = 0x12000, scoped, tag = 'internal scratch']
  #allocation2 [shape = 'f32[1,128]{1,0:T(1,128)}', space=vmem, size = 0x200, scoped, tag = 'scratch operand']
  %s0 = inlined_call_operand.vmem [shape: bf16[1,128], index: 0, kind: input, shape index: {}]
  %s1 = inlined_call_operand.vmem [shape: bf16[128,128], index: 1, kind: input, shape index: {}]
  %s2 = inlined_call_operand.vmem [shape: f32[1,128], index: 2, kind: input, shape index: {}]
  %s3 = inlined_call_operand.vmem [shape: f32[1,128], index: 3, kind: output, shape index: {}]
  %s4 = sld [smem:[#allocation0]]
  $region30: #{sparse_prepruned_forward.1} parent=0
    _
  %s6 = ssub.s32 1, %s4
  %s7 = scalar_select 0, %s6, %s4
  // Predicated region
  $region2: #{sparse_prepruned_forward.1} parent=0 // pred_check
    _
  $region3: #{sparse_prepruned_forward.1} parent=0 // pred_check_branch
    %9 = sbr.rel (0) target = $region5
  $region4: #{sparse_prepruned_forward.1} parent=0 // pred_region
    _
  $region5: #{sparse_prepruned_forward.1} parent=0 // pred_fallthru
    _
  // Predicated region
  $region6: #{sparse_prepruned_forward.1} parent=0 // pred_check
    _
  $region7: #{sparse_prepruned_forward.1} parent=0 // pred_check_branch
    %11 = sbr.rel (0) target = $region9
  $region8: #{sparse_prepruned_forward.1} parent=0 // pred_region
    _
  $region9: #{sparse_prepruned_forward.1} parent=0 // pred_fallthru
    _
  // Predicated region
  $region10: #{sparse_prepruned_forward.1} parent=0 // pred_check
    _
  $region11: #{sparse_prepruned_forward.1} parent=0 // pred_check_branch
    %13 = sbr.rel (0) target = $region13
  $region12: #{sparse_prepruned_forward.1} parent=0 // pred_region
    _
  $region13: #{sparse_prepruned_forward.1} parent=0 // pred_fallthru
    _
  %p15 = scmp.eq.s32.totalorder 0, 0
  // Predicated region
  $region14: #{sparse_prepruned_forward.1} parent=0 // pred_check
    %p16 = pneg %p15
  $region15: #{sparse_prepruned_forward.1} parent=0 // pred_check_branch
    %18 = sbr.rel (%p16) target = $region17
  $region16: #{sparse_prepruned_forward.1} parent=0 // pred_region
    %19 = vst [vmem:[#allocation2] sm:$0x1] 0.0
  $region17: #{sparse_prepruned_forward.1} parent=0 // pred_fallthru
    _
  %v20 = vld [vmem:[#allocation2] sm:$0x1]
  %v21 = vld [vmem:[%s0] sm:$0x1]
  %v22 = vld [vmem:[%s1] sm:$0xf]
  %v23 = vld [vmem:[%s1 + $0x4] sm:$0xf]
  %v24 = vld [vmem:[%s1 + $0x8] sm:$0xf]
  %v25 = vld [vmem:[%s1 + $0xc] sm:$0xf]
  %v26 = vld [vmem:[%s1 + $0x10] sm:$0xf]
  %v27 = vld [vmem:[%s1 + $0x14] sm:$0xf]
  %v28 = vld [vmem:[%s1 + $0x18] sm:$0xf]
  %v29 = vld [vmem:[%s1 + $0x1c] sm:$0xf]
  %v30 = vld [vmem:[%s1 + $0x20] sm:$0xf]
  %v31 = vld [vmem:[%s1 + $0x24] sm:$0xf]
  %v32 = vld [vmem:[%s1 + $0x28] sm:$0xf]
  %v33 = vld [vmem:[%s1 + $0x2c] sm:$0xf]
  %v34 = vld [vmem:[%s1 + $0x30] sm:$0xf]
  %v35 = vld [vmem:[%s1 + $0x34] sm:$0xf]
  %v36 = vld [vmem:[%s1 + $0x38] sm:$0xf]
  %v37 = vld [vmem:[%s1 + $0x3c] sm:$0xf]
  %v54 = vunpack.c.l.b16 %v22
  %v55 = vunpack.c.l.b16 %v23
  %v56 = vunpack.c.l.b16 %v24
  %v57 = vunpack.c.l.b16 %v25
  %v58 = vunpack.c.l.b16 %v26
  %v59 = vunpack.c.l.b16 %v27
  %v60 = vunpack.c.l.b16 %v28
  %v61 = vunpack.c.l.b16 %v29
  %v62 = vunpack.c.l.b16 %v30
  %v63 = vunpack.c.l.b16 %v31
  %v64 = vunpack.c.l.b16 %v32
  %v65 = vunpack.c.l.b16 %v33
  %v66 = vunpack.c.l.b16 %v34
  %v67 = vunpack.c.l.b16 %v35
  %v68 = vunpack.c.l.b16 %v36
  %v69 = vunpack.c.l.b16 %v37
  %v70 = vpack.c.b16 %v55, %v54
  %v71 = vpack.c.b16 %v57, %v56
  %v72 = vpack.c.b16 %v59, %v58
  %v73 = vpack.c.b16 %v61, %v60
  %v74 = vpack.c.b16 %v63, %v62
  %v75 = vpack.c.b16 %v65, %v64
  %v76 = vpack.c.b16 %v67, %v66
  %v77 = vpack.c.b16 %v69, %v68
  %86 = vmatprep.subr.bf16.mxu0 0
  %87 = vmatpush1.bf16.msra.mxu0 %v70
  %88 = vmatprep.subr.bf16.mxu0 0
  %89 = vmatpush1.bf16.msra.mxu0 %v71
  %90 = vmatprep.subr.bf16.mxu0 0
  %91 = vmatpush1.bf16.msra.mxu0 %v72
  %92 = vmatprep.subr.bf16.mxu0 0
  %93 = vmatpush1.bf16.msra.mxu0 %v73
  %94 = vmatprep.subr.bf16.mxu0 0
  %95 = vmatpush1.bf16.msra.mxu0 %v74
  %96 = vmatprep.subr.bf16.mxu0 0
  %97 = vmatpush1.bf16.msra.mxu0 %v75
  %98 = vmatprep.subr.bf16.mxu0 0
  %99 = vmatpush1.bf16.msra.mxu0 %v76
  %100 = vmatprep.subr.bf16.mxu0 0
  %101 = vmatpush1.bf16.msra.mxu0 %v77
  %102 = vmatprep.subr.bf16.mxu0 0
  %103 = vmatpush1.bf16.msra.mxu0 0
  %104 = vmatprep.subr.bf16.mxu0 0
  %105 = vmatpush1.bf16.msra.mxu0 0
  %106 = vmatprep.subr.bf16.mxu0 0
  %107 = vmatpush1.bf16.msra.mxu0 0
  %108 = vmatprep.subr.bf16.mxu0 0
  %109 = vmatpush1.bf16.msra.mxu0 0
  %110 = vmatprep.subr.bf16.mxu0 0
  %111 = vmatpush1.bf16.msra.mxu0 0
  %112 = vmatprep.subr.bf16.mxu0 0
  %113 = vmatpush1.bf16.msra.mxu0 0
  %114 = vmatprep.subr.bf16.mxu0 0
  %115 = vmatpush1.bf16.msra.mxu0 0
  %116 = vmatprep.subr.bf16.mxu0 0
  %117 = vmatpush1.bf16.msra.mxu0 0
  %118 = vmatprep.mubr.bf16.mxu0 0
  %119 = vmatmul.mubr.bf16.gmra.mrb[0].mxu0 %v21
  %v120 = vpop.f32.mrb[0].mxu0
  %v121 = vadd.f32 0.0, %v120
  %v122 = vpop.f32.mrb[0].mxu0
  %v123 = vpop.f32.mrb[0].mxu0
  %v124 = vpop.f32.mrb[0].mxu0
  %125 = vdwg.mxu0
  %v126 = vadd.f32 %v20, %v121
  %127 = vst [vmem:[#allocation2] sm:$0x1] %v126
  // Predicated region
  $region18: #{sparse_prepruned_forward.1} parent=0 // pred_check
    %p128 = pneg %p15
  $region19: #{sparse_prepruned_forward.1} parent=0 // pred_check_branch
    %130 = sbr.rel (%p128) target = $region21
  $region20: #{sparse_prepruned_forward.1} parent=0 // pred_region
    %v131 = vld [vmem:[#allocation2] sm:$0x1]
    %v132 = vld [vmem:[%s2] sm:$0x1]
    %v133 = vadd.f32 %v131, %v132
    %134 = vst [vmem:[%s3] sm:$0x1] %v133
  $region21: #{sparse_prepruned_forward.1} parent=0 // pred_fallthru
    _
  // Predicated region
  $region22: #{sparse_prepruned_forward.1} parent=0 // pred_check
    _
  $region23: #{sparse_prepruned_forward.1} parent=0 // pred_check_branch
    %136 = sbr.rel (0) target = $region25
  $region24: #{sparse_prepruned_forward.1} parent=0 // pred_region
    _
  $region25: #{sparse_prepruned_forward.1} parent=0 // pred_fallthru
    _
  // Predicated region
  $region26: #{sparse_prepruned_forward.1} parent=0 // pred_check
    _
  $region27: #{sparse_prepruned_forward.1} parent=0 // pred_check_branch
    %138 = sbr.rel (0) target = $region29
  $region28: #{sparse_prepruned_forward.1} parent=0 // pred_region
    _
  $region29: #{sparse_prepruned_forward.1} parent=0 // pred_fallthru
    _

</llo_original>
